<compile_context>
chip_gen: v7x
topology: tpu7x:2x2x1
jax: 0.10.0
libtpu: 0.0.40
codegen_flags: <defaults>
</compile_context>

<pallas_src>
import jax
import jax.numpy as jnp
from jax.experimental import pallas as pl
from jax.experimental.pallas import tpu as pltpu

NEG_SLOPE = 0.01                 # F.leaky_relu default negative_slope
LANE = 128
TILE_CAP = 16384                 # per-tile double-buffered x footprint ~16 MiB (f32, natural layout)
SMALL_BATCH_FALLBACK = 2048      # below this, plain-JAX is faster than pallas_call overhead

# Contract the last (feature) dim of both operands: (10,10) x (TB,10) -> (10,TB).
NT_DIMS = (((1,), (1,)), ((), ()))


def _leaky_relu(x):
    return jnp.where(x > 0, x, NEG_SLOPE * x)


def _round_up(n, m):
    return ((n + m - 1) // m) * m


def _choose_tile(B):
    """Batch tile (lane count): large to amortize per-step overhead, even tile
    count (>= 2) for v7x's two TensorCores, capped so VMEM fits everywhere."""
    B_lane = _round_up(max(B, 1), LANE)
    if B_lane <= 2 * LANE:
        return B_lane                                   # tiny batch: one small tile
    num_pairs = -(-B_lane // (2 * TILE_CAP))            # cdiv
    num_tiles = 2 * num_pairs                           # even, >= 2
    return _round_up(-(-B_lane // num_tiles), LANE)


def qnet_kernel(x_ref, w1_ref, b1_ref, w2_ref, b2_ref, w3_ref, b3_ref, o_ref):
    # x_ref: (TB, 10) natural (batch, feature) block, read straight from HBM.
    # Layer 1 in NT form puts batch on the lane dimension: h1T = W1 @ x^T.
    # (Default matmul precision matched the fp32 reference at <=1e-5 previously;
    #  pass precision=jax.lax.Precision.HIGHEST here if bit-parity is required.)
    h1 = jax.lax.dot_general(w1_ref[...], x_ref[...], NT_DIMS,
                             preferred_element_type=jnp.float32)      # (10, TB)
    h1 = _leaky_relu(h1 + b1_ref[...])

    h2 = jnp.dot(w2_ref[...], h1, preferred_element_type=jnp.float32) + b2_ref[...]
    h2 = _leaky_relu(h2)                                               # (10, TB)

    y = jnp.dot(w3_ref[...], h2, preferred_element_type=jnp.float32) + b3_ref[...]
    o_ref[...] = y.astype(o_ref.dtype)                                 # (1, TB) lane-dense


def qnet_reference(x, params):
    """Plain-JAX reference in PyTorch semantics (x @ W^T + b); also the small-batch path."""
    w1, b1, w2, b2, w3, b3 = params
    h = _leaky_relu(x @ w1.T + b1.T)
    h = _leaky_relu(h @ w2.T + b2.T)
    return (h @ w3.T + b3.T).astype(jnp.float32)


def qnet_forward(x, params, *, min_pallas_rows=SMALL_BATCH_FALLBACK):
    """x: (B, 10) float -> (B, 1) float32, matching fc3(leaky(fc2(leaky(fc1(x))))).float()."""
    w1, b1, w2, b2, w3, b3 = params
    x = x.astype(jnp.float32)                      # mirrors the module's .float()
    B, F_in = x.shape
    assert F_in == 10

    if B < min_pallas_rows:                        # small-batch fallback (review item)
        return qnet_reference(x, params)

    TB = _choose_tile(B)
    num_tiles = pl.cdiv(B, TB)
    B_out = num_tiles * TB                         # lane-padded output; 4 B/col, negligible

    const = lambda a: pl.BlockSpec(a.shape, lambda i: (0,) * a.ndim)

    yT = pl.pallas_call(
        qnet_kernel,
        out_shape=jax.ShapeDtypeStruct((1, B_out), jnp.float32),
        grid=(num_tiles,),
        in_specs=[
            pl.BlockSpec((TB, 10), lambda i: (i, 0)),   # x: natural layout, batch-tiled
            const(w1), const(b1),                       # weights/biases stay VMEM-resident
            const(w2), const(b2),
            const(w3), const(b3),
        ],
        out_specs=pl.BlockSpec((1, TB), lambda i: (0, i)),
        compiler_params=pltpu.CompilerParams(
            dimension_semantics=("parallel",),          # shard batch tiles across TCs (v7x)
            vmem_limit_bytes=32 * 1024 * 1024),         # > v5e's 16 MiB scoped default
    )(x, w1, b1, w2, b2, w3, b3)

    # Padded batch columns (rows >= B read garbage) land in output columns >= B
    # and are sliced away here; valid columns are untouched by them.
    return yT[:, :B].T                                   # (B, 1)


def init_params(key):
    """Deterministic synthetic parameters, PyTorch-native layouts.

    fc1: Linear(10, 10), fc2: Linear(10, 10), fc3: Linear(10, 1).
    Weights are (out, in); biases are stored as (out, 1) columns so they
    broadcast along the lane (batch) dimension inside the kernel.
    """
    ks = jax.random.split(key, 6)
    w1 = jax.random.normal(ks[0], (10, 10), jnp.float32) * 0.1
    b1 = jax.random.normal(ks[1], (10, 1), jnp.float32) * 0.1
    w2 = jax.random.normal(ks[2], (10, 10), jnp.float32) * 0.1
    b2 = jax.random.normal(ks[3], (10, 1), jnp.float32) * 0.1
    w3 = jax.random.normal(ks[4], (1, 10), jnp.float32) * 0.1
    b3 = jax.random.normal(ks[5], (1, 1), jnp.float32) * 0.1
    return (w1, b1, w2, b2, w3, b3)


# TODO(synk): action-space construction / epsilon-greedy get_next_move are host-side
# control flow around the forward pass and are not implemented as kernels.

if __name__ == "__main__":
    key = jax.random.PRNGKey(0)
    pkey, k1, k2 = jax.random.split(key, 3)

    params = init_params(pkey)
    # Rows are concat(state, action) of width 10, as fc1 expects.
    x_small = jax.random.normal(k1, (8, 10), jnp.float32)
    x_ragged = jax.random.normal(k2, (300, 10), jnp.float32)   # exercises partial edge tiles

    # Force the Pallas path even at tiny B so the kernel itself is exercised.
    out_small = jax.block_until_ready(qnet_forward(x_small, params, min_pallas_rows=0))
    out_ragged = jax.block_until_ready(qnet_forward(x_ragged, params, min_pallas_rows=0))
    # Default dispatch: small batches take the plain-JAX fallback path.
    out_fallback = jax.block_until_ready(qnet_forward(x_small, params))

    ref_small = qnet_reference(x_small, params)
    ref_ragged = qnet_reference(x_ragged, params)

    assert out_small.shape == (8, 1) and out_small.dtype == jnp.float32
    assert out_ragged.shape == (300, 1) and out_ragged.dtype == jnp.float32
    assert jnp.allclose(out_small, ref_small, atol=1e-4, rtol=1e-4)
    assert jnp.allclose(out_ragged, ref_ragged, atol=1e-4, rtol=1e-4)
    assert jnp.allclose(out_fallback, ref_small, atol=1e-5, rtol=1e-5)

    print("KERNEL_OK")
</pallas_src>

<mosaic_0001>
module attributes {stable_mosaic.version = 11 : i64} {
  func.func @qnet_kernel(%arg0: i32, %arg1: memref<128x10xf32, #tpu.memory_space<vmem>>, %arg2: memref<10x10xf32, #tpu.memory_space<vmem>>, %arg3: memref<10x1xf32, #tpu.memory_space<vmem>>, %arg4: memref<10x10xf32, #tpu.memory_space<vmem>>, %arg5: memref<10x1xf32, #tpu.memory_space<vmem>>, %arg6: memref<1x10xf32, #tpu.memory_space<vmem>>, %arg7: memref<1x1xf32, #tpu.memory_space<vmem>>, %arg8: memref<1x128xf32, #tpu.memory_space<vmem>>) attributes {dimension_semantics = [#tpu.dimension_semantics<parallel>], iteration_bounds = array<i64: 1>, scalar_prefetch = 0 : i64, scratch_operands = 0 : i64, tpu.core_type = #tpu.core_type<tc>, window_params = [{transform_indices = @transform_0, window_bounds = array<i64: 128, 10>}, {pipeline_mode = #tpu.pipeline_mode<synchronous>, transform_indices = @transform_1, window_bounds = array<i64: 10, 10>}, {pipeline_mode = #tpu.pipeline_mode<synchronous>, transform_indices = @transform_2, window_bounds = array<i64: 10, 1>}, {pipeline_mode = #tpu.pipeline_mode<synchronous>, transform_indices = @transform_3, window_bounds = array<i64: 10, 10>}, {pipeline_mode = #tpu.pipeline_mode<synchronous>, transform_indices = @transform_4, window_bounds = array<i64: 10, 1>}, {pipeline_mode = #tpu.pipeline_mode<synchronous>, transform_indices = @transform_5, window_bounds = array<i64: 1, 10>}, {pipeline_mode = #tpu.pipeline_mode<synchronous>, transform_indices = @transform_6, window_bounds = array<i64: 1, 1>}, {transform_indices = @transform_7, window_bounds = array<i64: 1, 128>}]} {
    %c0 = arith.constant 0 : index
    %c0_0 = arith.constant 0 : index
    %0 = vector.load %arg2[%c0, %c0_0] : memref<10x10xf32, #tpu.memory_space<vmem>>, vector<10x10xf32>
    %c0_1 = arith.constant 0 : index
    %c0_2 = arith.constant 0 : index
    %1 = vector.load %arg1[%c0_1, %c0_2] : memref<128x10xf32, #tpu.memory_space<vmem>>, vector<128x10xf32>
    %cst = arith.constant dense<0.000000e+00> : vector<10x128xf32>
    %2 = tpu.matmul %0, %1, %cst {dimension_numbers = #tpu.dot_dimension_numbers<[1], [1], [0], [0], [0, 0, 1, 0], [], []>} : vector<10x10xf32>, vector<128x10xf32>, vector<10x128xf32> -> vector<10x128xf32>
    %c0_3 = arith.constant 0 : index
    %c0_4 = arith.constant 0 : index
    %3 = vector.load %arg3[%c0_3, %c0_4] : memref<10x1xf32, #tpu.memory_space<vmem>>, vector<10x1xf32>
    %4 = vector.broadcast %3 : vector<10x1xf32> to vector<10x128xf32>
    %5 = arith.addf %2, %4 : vector<10x128xf32>
    %cst_5 = arith.constant 0.000000e+00 : f32
    %6 = vector.broadcast %cst_5 : f32 to vector<10x128xf32>
    %7 = arith.cmpf ogt, %5, %6 : vector<10x128xf32>
    %cst_6 = arith.constant 0.00999999977 : f32
    %8 = vector.broadcast %cst_6 : f32 to vector<10x128xf32>
    %9 = arith.mulf %8, %5 : vector<10x128xf32>
    %10 = arith.select %7, %5, %9 : vector<10x128xi1>, vector<10x128xf32>
    %c0_7 = arith.constant 0 : index
    %c0_8 = arith.constant 0 : index
    %11 = vector.load %arg4[%c0_7, %c0_8] : memref<10x10xf32, #tpu.memory_space<vmem>>, vector<10x10xf32>
    %cst_9 = arith.constant dense<0.000000e+00> : vector<10x128xf32>
    %12 = tpu.matmul %11, %10, %cst_9 {dimension_numbers = #tpu.dot_dimension_numbers<[1], [0], [0], [1], [0, 0, 1, 1], [], []>} : vector<10x10xf32>, vector<10x128xf32>, vector<10x128xf32> -> vector<10x128xf32>
    %c0_10 = arith.constant 0 : index
    %c0_11 = arith.constant 0 : index
    %13 = vector.load %arg5[%c0_10, %c0_11] : memref<10x1xf32, #tpu.memory_space<vmem>>, vector<10x1xf32>
    %14 = vector.broadcast %13 : vector<10x1xf32> to vector<10x128xf32>
    %15 = arith.addf %12, %14 : vector<10x128xf32>
    %cst_12 = arith.constant 0.000000e+00 : f32
    %16 = vector.broadcast %cst_12 : f32 to vector<10x128xf32>
    %17 = arith.cmpf ogt, %15, %16 : vector<10x128xf32>
    %cst_13 = arith.constant 0.00999999977 : f32
    %18 = vector.broadcast %cst_13 : f32 to vector<10x128xf32>
    %19 = arith.mulf %18, %15 : vector<10x128xf32>
    %20 = arith.select %17, %15, %19 : vector<10x128xi1>, vector<10x128xf32>
    %c0_14 = arith.constant 0 : index
    %c0_15 = arith.constant 0 : index
    %21 = vector.load %arg6[%c0_14, %c0_15] : memref<1x10xf32, #tpu.memory_space<vmem>>, vector<1x10xf32>
    %cst_16 = arith.constant dense<0.000000e+00> : vector<1x128xf32>
    %22 = tpu.matmul %21, %20, %cst_16 {dimension_numbers = #tpu.dot_dimension_numbers<[1], [0], [0], [1], [0, 0, 1, 1], [], []>} : vector<1x10xf32>, vector<10x128xf32>, vector<1x128xf32> -> vector<1x128xf32>
    %c0_17 = arith.constant 0 : index
    %c0_18 = arith.constant 0 : index
    %23 = vector.load %arg7[%c0_17, %c0_18] : memref<1x1xf32, #tpu.memory_space<vmem>>, vector<1x1xf32>
    %24 = vector.broadcast %23 : vector<1x1xf32> to vector<1x128xf32>
    %25 = arith.addf %22, %24 : vector<1x128xf32>
    %c0_19 = arith.constant 0 : index
    %c0_20 = arith.constant 0 : index
    %26 = vector.load %arg8[%c0_19, %c0_20] : memref<1x128xf32, #tpu.memory_space<vmem>>, vector<1x128xf32>
    tpu.vector_store %arg8[%c0_19, %c0_20], %25 {strides = array<i32>} : memref<1x128xf32, #tpu.memory_space<vmem>>, vector<1x128xf32>,
    return
  }
  func.func @transform_0(%arg0: i32) -> (i32, i32) {
    %c0_i32 = arith.constant 0 : i32
    %c0_i32_0 = arith.constant 0 : i32
    return %arg0, %c0_i32 : i32, i32
  }
  func.func @transform_1(%arg0: i32) -> (i32, i32) {
    %c0_i32 = arith.constant 0 : i32
    %c0_i32_0 = arith.constant 0 : i32
    %c0_i32_1 = arith.constant 0 : i32
    return %c0_i32, %c0_i32_0 : i32, i32
  }
  func.func @transform_2(%arg0: i32) -> (i32, i32) {
    %c0_i32 = arith.constant 0 : i32
    %c0_i32_0 = arith.constant 0 : i32
    %c0_i32_1 = arith.constant 0 : i32
    return %c0_i32, %c0_i32_0 : i32, i32
  }
  func.func @transform_3(%arg0: i32) -> (i32, i32) {
    %c0_i32 = arith.constant 0 : i32
    %c0_i32_0 = arith.constant 0 : i32
    %c0_i32_1 = arith.constant 0 : i32
    return %c0_i32, %c0_i32_0 : i32, i32
  }
  func.func @transform_4(%arg0: i32) -> (i32, i32) {
    %c0_i32 = arith.constant 0 : i32
    %c0_i32_0 = arith.constant 0 : i32
    %c0_i32_1 = arith.constant 0 : i32
    return %c0_i32, %c0_i32_0 : i32, i32
  }
  func.func @transform_5(%arg0: i32) -> (i32, i32) {
    %c0_i32 = arith.constant 0 : i32
    %c0_i32_0 = arith.constant 0 : i32
    %c0_i32_1 = arith.constant 0 : i32
    return %c0_i32, %c0_i32_0 : i32, i32
  }
  func.func @transform_6(%arg0: i32) -> (i32, i32) {
    %c0_i32 = arith.constant 0 : i32
    %c0_i32_0 = arith.constant 0 : i32
    %c0_i32_1 = arith.constant 0 : i32
    return %c0_i32, %c0_i32_0 : i32, i32
  }
  func.func @transform_7(%arg0: i32) -> (i32, i32) {
    %c0_i32 = arith.constant 0 : i32
    %c0_i32_0 = arith.constant 0 : i32
    return %c0_i32, %arg0 : i32, i32
  }
}

</mosaic_0001>

<llo_original>
// kernel: tpu_custom_call.1
$region0: #{tpu_custom_call.1}
  #allocation0 [shape = 'u32[]', space=smem, size = 0x4, offset = 0x4, fixed_abs, tag = 'smem constant byte address 0x4 - core index']
  #allocation1 [shape = 'u32[144,128]{1,0:T(1,128)}', space=vmem, size = 0x12000, scoped, tag = 'internal scratch']
  #allocation2 [shape = 'f32[1,1]{1,0:T(1,128)S(1)}', space=vmem, size = 0x200, scoped, tag = 'scoped memory for tpu_custom_call.1']
  %s0 = inlined_call_operand.hbm [shape: f32[8,10], index: 0, kind: input, shape index: {}]
  %s1 = inlined_call_operand.vmem [shape: f32[10,10], index: 1, kind: input, shape index: {}]
  %s2 = inlined_call_operand.vmem [shape: f32[10,1], index: 2, kind: input, shape index: {}]
  %s3 = inlined_call_operand.vmem [shape: f32[10,10], index: 3, kind: input, shape index: {}]
  %s4 = inlined_call_operand.vmem [shape: f32[10,1], index: 4, kind: input, shape index: {}]
  %s5 = inlined_call_operand.vmem [shape: f32[1,10], index: 5, kind: input, shape index: {}]
  %s6 = inlined_call_operand.<no memory space> [shape: f32[1,1], index: 6, kind: input, shape index: {}]
  %s7 = inlined_call_operand.hbm [shape: f32[1,128], index: 7, kind: output, shape index: {}]
  %s8 = sld [smem:[#allocation0]]
  $region42: #{tpu_custom_call.1} parent=0
    _
  %s10 = ssub.s32 1, %s8
  %s11 = scalar_select 0, %s10, %s8
  %v12 = vstv %s6
  %13 = vst [vmem:[#allocation2] sm:$0x1] %v12
  $region1: #{tpu_custom_call.1} parent=0
    #allocation3 [shape = 'u8[65536]{0}', space=vmem, size = 0x10000, scoped, tag = 'input window, operand 0, single buffered']
    #allocation4 [shape = 's32[1]{0}', space=sflag, size = 0x4, scoped, tag = 'scoped memory for tpu_custom_call.1']
    #allocation5 [shape = 's32[1]{0}', space=sflag, size = 0x4, scoped, tag = 'scoped memory for tpu_custom_call.1']
    #allocation6 [shape = 'u8[512]{0}', space=vmem, size = 0x400, scoped, tag = 'output window, operand 0, single buffered']
    %14 = vsyncpa [#allocation4], 0
    %15 = vsyncpa [#allocation5], 0
    // Predicated region
    $region2: #{tpu_custom_call.1} parent=1 // pred_check
      _
    $region3: #{tpu_custom_call.1} parent=1 // pred_check_branch
      %17 = sbr.rel (0) target = $region5
    $region4: #{tpu_custom_call.1} parent=1 // pred_region
      %s19 = ssub.s32 2048, 128
      %20 = vsyncadd [#allocation4], %s19
      %s21 = sshll.u32 [#allocation3], 4
      %s22 = int_to_ptr.vmem [resolvable:$true] %s21
      %27 = dma.hbm_to_vmem [thread:$0]  %s0, 128, %s22, [#allocation4], 128, 128, 8
    $region5: #{tpu_custom_call.1} parent=1 // pred_fallthru
      _
    // Predicated region
    $region6: #{tpu_custom_call.1} parent=1 // pred_check
      _
    $region7: #{tpu_custom_call.1} parent=1 // pred_check_branch
      %29 = sbr.rel (0) target = $region9
    $region8: #{tpu_custom_call.1} parent=1 // pred_region
      _
    $region9: #{tpu_custom_call.1} parent=1 // pred_fallthru
      _
    // Predicated region
    $region10: #{tpu_custom_call.1} parent=1 // pred_check
      _
    $region11: #{tpu_custom_call.1} parent=1 // pred_check_branch
      %31 = sbr.rel (0) target = $region13
    $region12: #{tpu_custom_call.1} parent=1 // pred_region
      _
    $region13: #{tpu_custom_call.1} parent=1 // pred_fallthru
      _
    // Predicated region
    $region14: #{tpu_custom_call.1} parent=1 // pred_check
      _
    $region15: #{tpu_custom_call.1} parent=1 // pred_check_branch
      %33 = sbr.rel (0) target = $region17
    $region16: #{tpu_custom_call.1} parent=1 // pred_region
      _
    $region17: #{tpu_custom_call.1} parent=1 // pred_fallthru
      _
    // Predicated region
    $region18: #{tpu_custom_call.1} parent=1 // pred_check
      _
    $region19: #{tpu_custom_call.1} parent=1 // pred_check_branch
      %35 = sbr.rel (0) target = $region21
    $region20: #{tpu_custom_call.1} parent=1 // pred_region
      _
    $region21: #{tpu_custom_call.1} parent=1 // pred_fallthru
      _
    // Predicated region
    $region22: #{tpu_custom_call.1} parent=1 // pred_check
      _
    $region23: #{tpu_custom_call.1} parent=1 // pred_check_branch
      %37 = sbr.rel (0) target = $region25
    $region24: #{tpu_custom_call.1} parent=1 // pred_region
      _
    $region25: #{tpu_custom_call.1} parent=1 // pred_fallthru
      _
    // Predicated region
    $region26: #{tpu_custom_call.1} parent=1 // pred_check
      _
    $region27: #{tpu_custom_call.1} parent=1 // pred_check_branch
      %39 = sbr.rel (0) target = $region29
    $region28: #{tpu_custom_call.1} parent=1 // pred_region
      _
    $region29: #{tpu_custom_call.1} parent=1 // pred_fallthru
      _
    // Predicated region
    $region30: #{tpu_custom_call.1} parent=1 // pred_check
      _
    $region31: #{tpu_custom_call.1} parent=1 // pred_check_branch
      %41 = sbr.rel (0) target = $region33
    $region32: #{tpu_custom_call.1} parent=1 // pred_region
      %42 = dma.done [#allocation4], 2048
    $region33: #{tpu_custom_call.1} parent=1 // pred_fallthru
      _
    %v43 = vld [vmem:[%s1] sm:$0xff]
    %v44 = vld [vmem:[%s1 + $0x8] sm:$0x3]
    %v45 = vld [vmem:[#allocation3] sm:$0xff]
    %v46 = vld [vmem:[#allocation3 + $0x8] sm:$0xff]
    %v47 = vld [vmem:[#allocation3 + $0x10] sm:$0xff]
    %v48 = vld [vmem:[#allocation3 + $0x18] sm:$0xff]
    %v49 = vld [vmem:[#allocation3 + $0x20] sm:$0xff]
    %v50 = vld [vmem:[#allocation3 + $0x28] sm:$0xff]
    %v51 = vld [vmem:[#allocation3 + $0x30] sm:$0xff]
    %v52 = vld [vmem:[#allocation3 + $0x38] sm:$0xff]
    %v53 = vld [vmem:[#allocation3 + $0x40] sm:$0xff]
    %v54 = vld [vmem:[#allocation3 + $0x48] sm:$0xff]
    %v55 = vld [vmem:[#allocation3 + $0x50] sm:$0xff]
    %v56 = vld [vmem:[#allocation3 + $0x58] sm:$0xff]
    %v57 = vld [vmem:[#allocation3 + $0x60] sm:$0xff]
    %v58 = vld [vmem:[#allocation3 + $0x68] sm:$0xff]
    %v59 = vld [vmem:[#allocation3 + $0x70] sm:$0xff]
    %v60 = vld [vmem:[#allocation3 + $0x78] sm:$0xff]
    %v61 = vld [vmem:[%s2] sm:$0xff]
    %v62 = vld [vmem:[%s2 + $0x8] sm:$0x3]
    %64 = vset.pattern.permute.xlu0 0
    %65 = vperm.xlu0 %64, %v61
    %v66 = vpop.permute.xlu0 %65
    %69 = vset.pattern.permute.xlu0 0
    %70 = vperm.xlu0 %69, %v62
    %v71 = vpop.permute.xlu0 %70
    %vm73 = vcmask 80896
    %v75 = vsel %vm73, %v43, 0
    %v78 = vsel %vm73, %v44, 0
    %v81 = vsel %vm73, %v45, 0
    %v84 = vsel %vm73, %v46, 0
    %v87 = vsel %vm73, %v47, 0
    %v90 = vsel %vm73, %v48, 0
    %v93 = vsel %vm73, %v49, 0
    %v96 = vsel %vm73, %v50, 0
    %v99 = vsel %vm73, %v51, 0
    %v102 = vsel %vm73, %v52, 0
    %v105 = vsel %vm73, %v53, 0
    %v108 = vsel %vm73, %v54, 0
    %v111 = vsel %vm73, %v55, 0
    %v114 = vsel %vm73, %v56, 0
    %v117 = vsel %vm73, %v57, 0
    %v120 = vsel %vm73, %v58, 0
    %v123 = vsel %vm73, %v59, 0
    %v126 = vsel %vm73, %v60, 0
    %128 = vmatprep.subr.mxu0 0.0
    %129 = vmatpush1.xpose.msra.mxu0 %v81
    %130 = vmatprep.subr.mxu0 0.0
    %131 = vmatpush1.xpose.msra.mxu0 %v84
    %132 = vmatprep.subr.mxu0 0.0
    %133 = vmatpush1.xpose.msra.mxu0 %v87
    %134 = vmatprep.subr.mxu0 0.0
    %135 = vmatpush1.xpose.msra.mxu0 %v90
    %136 = vmatprep.subr.mxu0 0.0
    %137 = vmatpush1.xpose.msra.mxu0 %v93
    %138 = vmatprep.subr.mxu0 0.0
    %139 = vmatpush1.xpose.msra.mxu0 %v96
    %140 = vmatprep.subr.mxu0 0.0
    %141 = vmatpush1.xpose.msra.mxu0 %v99
    %142 = vmatprep.subr.mxu0 0.0
    %143 = vmatpush1.xpose.msra.mxu0 %v102
    %144 = vmatprep.subr.mxu0 0.0
    %145 = vmatpush1.xpose.msra.mxu0 %v105
    %146 = vmatprep.subr.mxu0 0.0
    %147 = vmatpush1.xpose.msra.mxu0 %v108
    %148 = vmatprep.subr.mxu0 0.0
    %149 = vmatpush1.xpose.msra.mxu0 %v111
    %150 = vmatprep.subr.mxu0 0.0
    %151 = vmatpush1.xpose.msra.mxu0 %v114
    %152 = vmatprep.subr.mxu0 0.0
    %153 = vmatpush1.xpose.msra.mxu0 %v117
    %154 = vmatprep.subr.mxu0 0.0
    %155 = vmatpush1.xpose.msra.mxu0 %v120
    %156 = vmatprep.subr.mxu0 0.0
    %157 = vmatpush1.xpose.msra.mxu0 %v123
    %158 = vmatprep.subr.mxu0 0.0
    %159 = vmatpush1.xpose.msra.mxu0 %v126
    %160 = vmatprep.subr.mxu0 0.0
    %161 = vmatpush1.xpose.msra.mxu0 0.0
    %162 = vmatprep.subr.mxu0 0.0
    %163 = vmatpush1.xpose.msra.mxu0 0.0
    %164 = vmatprep.subr.mxu0 0.0
    %165 = vmatpush1.xpose.msra.mxu0 0.0
    %166 = vmatprep.subr.mxu0 0.0
    %167 = vmatpush1.xpose.msra.mxu0 0.0
    %168 = vmatprep.subr.mxu0 0.0
    %169 = vmatpush1.xpose.msra.mxu0 0.0
    %170 = vmatprep.subr.mxu0 0.0
    %171 = vmatpush1.xpose.msra.mxu0 0.0
    %172 = vmatprep.subr.mxu0 0.0
    %173 = vmatpush1.xpose.msra.mxu0 0.0
    %174 = vmatprep.subr.mxu0 0.0
    %175 = vmatpush1.xpose.msra.mxu0 0.0
    %176 = vmatprep.subr.mxu0 0.0
    %177 = vmatpush1.xpose.msra.mxu0 0.0
    %178 = vmatprep.subr.mxu0 0.0
    %179 = vmatpush1.xpose.msra.mxu0 0.0
    %180 = vmatprep.subr.mxu0 0.0
    %181 = vmatpush1.xpose.msra.mxu0 0.0
    %182 = vmatprep.subr.mxu0 0.0
    %183 = vmatpush1.xpose.msra.mxu0 0.0
    %184 = vmatprep.subr.mxu0 0.0
    %185 = vmatpush1.xpose.msra.mxu0 0.0
    %186 = vmatprep.subr.mxu0 0.0
    %187 = vmatpush1.xpose.msra.mxu0 0.0
    %188 = vmatprep.subr.mxu0 0.0
    %189 = vmatpush1.xpose.msra.mxu0 0.0
    %190 = vmatprep.subr.mxu0 0.0
    %191 = vmatpush1.xpose.msra.mxu0 0.0
    %192 = vmatprep.mubr.f32.mxu0 0.0
    %193 = vmatmul.mubr.f32.gmra.mrb[0].mxu0 %v75
    %v194 = vpop.f32.mrb[0].mxu0
    %v195 = vadd.f32 %v66, %v194
    %v196 = vpop.f32.mrb[0].mxu0
    %197 = vmatprep.mubr.f32.mxu0 0.0
    %198 = vmatmul.mubr.f32.gmra.mrb[0].mxu0 %v78
    %v199 = vpop.f32.mrb[0].mxu0
    %v200 = vadd.f32 %v71, %v199
    %v201 = vpop.f32.mrb[0].mxu0
    %202 = vdwg.mxu0
    %vm203 = vcmp.gt.f32.partialorder %v195, 0.0
    %vm204 = vcmp.gt.f32.partialorder %v200, 0.0
    %v205 = vmul.f32 %v195, 0.01
    %v206 = vmul.f32 %v200, 0.01
    %v207 = vsel %vm203, %v195, %v205
    %v208 = vsel %vm204, %v200, %v206
    %v209 = vld [vmem:[%s3] sm:$0xff]
    %v210 = vld [vmem:[%s3 + $0x8] sm:$0x3]
    %v211 = vld [vmem:[%s4] sm:$0xff]
    %v212 = vld [vmem:[%s4 + $0x8] sm:$0x3]
    %214 = vset.pattern.permute.xlu0 0
    %215 = vperm.xlu0 %214, %v211
    %v216 = vpop.permute.xlu0 %215
    %219 = vset.pattern.permute.xlu0 0
    %220 = vperm.xlu0 %219, %v212
    %v221 = vpop.permute.xlu0 %220
    %v224 = vsel %vm73, %v209, 0
    %v227 = vsel %vm73, %v210, 0
    %vm229 = vcmask 1041408
    %v231 = vsel %vm229, %v208, 0
    %233 = vmatprep.subr.mxu0 0.0
    %234 = vmatpush1.msra.mxu0 %v207
    %235 = vmatprep.subr.mxu0 0.0
    %236 = vmatpush1.msra.mxu0 %v231
    %237 = vmatprep.subr.mxu0 0.0
    %238 = vmatpush1.msra.mxu0 0.0
    %239 = vmatprep.subr.mxu0 0.0
    %240 = vmatpush1.msra.mxu0 0.0
    %241 = vmatprep.subr.mxu0 0.0
    %242 = vmatpush1.msra.mxu0 0.0
    %243 = vmatprep.subr.mxu0 0.0
    %244 = vmatpush1.msra.mxu0 0.0
    %245 = vmatprep.subr.mxu0 0.0
    %246 = vmatpush1.msra.mxu0 0.0
    %247 = vmatprep.subr.mxu0 0.0
    %248 = vmatpush1.msra.mxu0 0.0
    %249 = vmatprep.subr.mxu0 0.0
    %250 = vmatpush1.msra.mxu0 0.0
    %251 = vmatprep.subr.mxu0 0.0
    %252 = vmatpush1.msra.mxu0 0.0
    %253 = vmatprep.subr.mxu0 0.0
    %254 = vmatpush1.msra.mxu0 0.0
    %255 = vmatprep.subr.mxu0 0.0
    %256 = vmatpush1.msra.mxu0 0.0
    %257 = vmatprep.subr.mxu0 0.0
    %258 = vmatpush1.msra.mxu0 0.0
    %259 = vmatprep.subr.mxu0 0.0
    %260 = vmatpush1.msra.mxu0 0.0
    %261 = vmatprep.subr.mxu0 0.0
    %262 = vmatpush1.msra.mxu0 0.0
    %263 = vmatprep.subr.mxu0 0.0
    %264 = vmatpush1.msra.mxu0 0.0
    %265 = vmatprep.subr.mxu0 0.0
    %266 = vmatpush1.msra.mxu0 0.0
    %267 = vmatprep.subr.mxu0 0.0
    %268 = vmatpush1.msra.mxu0 0.0
    %269 = vmatprep.subr.mxu0 0.0
    %270 = vmatpush1.msra.mxu0 0.0
    %271 = vmatprep.subr.mxu0 0.0
    %272 = vmatpush1.msra.mxu0 0.0
    %273 = vmatprep.subr.mxu0 0.0
    %274 = vmatpush1.msra.mxu0 0.0
    %275 = vmatprep.subr.mxu0 0.0
    %276 = vmatpush1.msra.mxu0 0.0
    %277 = vmatprep.subr.mxu0 0.0
    %278 = vmatpush1.msra.mxu0 0.0
    %279 = vmatprep.subr.mxu0 0.0
    %280 = vmatpush1.msra.mxu0 0.0
    %281 = vmatprep.subr.mxu0 0.0
    %282 = vmatpush1.msra.mxu0 0.0
    %283 = vmatprep.subr.mxu0 0.0
    %284 = vmatpush1.msra.mxu0 0.0
    %285 = vmatprep.subr.mxu0 0.0
    %286 = vmatpush1.msra.mxu0 0.0
    %287 = vmatprep.subr.mxu0 0.0
    %288 = vmatpush1.msra.mxu0 0.0
    %289 = vmatprep.subr.mxu0 0.0
    %290 = vmatpush1.msra.mxu0 0.0
    %291 = vmatprep.subr.mxu0 0.0
    %292 = vmatpush1.msra.mxu0 0.0
    %293 = vmatprep.subr.mxu0 0.0
    %294 = vmatpush1.msra.mxu0 0.0
    %295 = vmatprep.subr.mxu0 0.0
    %296 = vmatpush1.msra.mxu0 0.0
    %297 = vmatprep.mubr.f32.mxu0 0.0
    %298 = vmatmul.mubr.f32.gmra.mrb[0].mxu0 %v224
    %v299 = vpop.f32.mrb[0].mxu0
    %v300 = vadd.f32 %v216, %v299
    %v301 = vpop.f32.mrb[0].mxu0
    %302 = vmatprep.mubr.f32.mxu0 0.0
    %303 = vmatmul.mubr.f32.gmra.mrb[0].mxu0 %v227
    %v304 = vpop.f32.mrb[0].mxu0
    %v305 = vadd.f32 %v221, %v304
    %v306 = vpop.f32.mrb[0].mxu0
    %307 = vdwg.mxu0
    %vm308 = vcmp.gt.f32.partialorder %v300, 0.0
    %vm309 = vcmp.gt.f32.partialorder %v305, 0.0
    %v310 = vmul.f32 %v300, 0.01
    %v311 = vmul.f32 %v305, 0.01
    %v312 = vsel %vm308, %v300, %v310
    %v313 = vsel %vm309, %v305, %v311
    %v314 = vld [vmem:[%s5] sm:$0x1]
    %v315 = vld [vmem:[#allocation2] sm:$0x1]
    %317 = vset.pattern.permute.xlu0 0
    %318 = vperm.xlu0 %317, %v315
    %v319 = vpop.permute.xlu0 %318
    %v321 = vlaneseq
    %v322 = vshrl.u32 %v321, 7
    %v323 = vsub.s32 0, %v322
    %v324 = vrot.slane %v319, %v323
    %v326 = vsel %vm73, %v314, 0
    %v329 = vsel %vm229, %v313, 0
    %331 = vmatprep.subr.mxu0 0.0
    %332 = vmatpush1.msra.mxu0 %v312
    %333 = vmatprep.subr.mxu0 0.0
    %334 = vmatpush1.msra.mxu0 %v329
    %335 = vmatprep.subr.mxu0 0.0
    %336 = vmatpush1.msra.mxu0 0.0
    %337 = vmatprep.subr.mxu0 0.0
    %338 = vmatpush1.msra.mxu0 0.0
    %339 = vmatprep.subr.mxu0 0.0
    %340 = vmatpush1.msra.mxu0 0.0
    %341 = vmatprep.subr.mxu0 0.0
    %342 = vmatpush1.msra.mxu0 0.0
    %343 = vmatprep.subr.mxu0 0.0
    %344 = vmatpush1.msra.mxu0 0.0
    %345 = vmatprep.subr.mxu0 0.0
    %346 = vmatpush1.msra.mxu0 0.0
    %347 = vmatprep.subr.mxu0 0.0
    %348 = vmatpush1.msra.mxu0 0.0
    %349 = vmatprep.subr.mxu0 0.0
    %350 = vmatpush1.msra.mxu0 0.0
    %351 = vmatprep.subr.mxu0 0.0
    %352 = vmatpush1.msra.mxu0 0.0
    %353 = vmatprep.subr.mxu0 0.0
    %354 = vmatpush1.msra.mxu0 0.0
    %355 = vmatprep.subr.mxu0 0.0
    %356 = vmatpush1.msra.mxu0 0.0
    %357 = vmatprep.subr.mxu0 0.0
    %358 = vmatpush1.msra.mxu0 0.0
    %359 = vmatprep.subr.mxu0 0.0
    %360 = vmatpush1.msra.mxu0 0.0
    %361 = vmatprep.subr.mxu0 0.0
    %362 = vmatpush1.msra.mxu0 0.0
    %363 = vmatprep.subr.mxu0 0.0
    %364 = vmatpush1.msra.mxu0 0.0
    %365 = vmatprep.subr.mxu0 0.0
    %366 = vmatpush1.msra.mxu0 0.0
    %367 = vmatprep.subr.mxu0 0.0
    %368 = vmatpush1.msra.mxu0 0.0
    %369 = vmatprep.subr.mxu0 0.0
    %370 = vmatpush1.msra.mxu0 0.0
    %371 = vmatprep.subr.mxu0 0.0
    %372 = vmatpush1.msra.mxu0 0.0
    %373 = vmatprep.subr.mxu0 0.0
    %374 = vmatpush1.msra.mxu0 0.0
    %375 = vmatprep.subr.mxu0 0.0
    %376 = vmatpush1.msra.mxu0 0.0
    %377 = vmatprep.subr.mxu0 0.0
    %378 = vmatpush1.msra.mxu0 0.0
    %379 = vmatprep.subr.mxu0 0.0
    %380 = vmatpush1.msra.mxu0 0.0
    %381 = vmatprep.subr.mxu0 0.0
    %382 = vmatpush1.msra.mxu0 0.0
    %383 = vmatprep.subr.mxu0 0.0
    %384 = vmatpush1.msra.mxu0 0.0
    %385 = vmatprep.subr.mxu0 0.0
    %386 = vmatpush1.msra.mxu0 0.0
    %387 = vmatprep.subr.mxu0 0.0
    %388 = vmatpush1.msra.mxu0 0.0
    %389 = vmatprep.subr.mxu0 0.0
    %390 = vmatpush1.msra.mxu0 0.0
    %391 = vmatprep.subr.mxu0 0.0
    %392 = vmatpush1.msra.mxu0 0.0
    %393 = vmatprep.subr.mxu0 0.0
    %394 = vmatpush1.msra.mxu0 0.0
    %395 = vmatprep.mubr.f32.mxu0 0.0
    %396 = vmatmul.mubr.f32.gmra.mrb[0].mxu0 %v326
    %v397 = vpop.f32.mrb[0].mxu0
    %v398 = vadd.f32 %v324, %v397
    %v399 = vpop.f32.mrb[0].mxu0
    %400 = vdwg.mxu0
    %401 = vst [vmem:[#allocation6] sm:$0x1] %v398
    // Predicated region
    $region34: #{tpu_custom_call.1} parent=1 // pred_check
      _
    $region35: #{tpu_custom_call.1} parent=1 // pred_check_branch
      %403 = sbr.rel (0) target = $region37
    $region36: #{tpu_custom_call.1} parent=1 // pred_region
      %s405 = ssub.s32 16, 16
      %406 = vsyncadd [#allocation5], %s405
      %s408 = sshll.u32 [#allocation6], 4
      %s409 = int_to_ptr.vmem [resolvable:$true] %s408
      %411 = dma.vmem_to_hbm [thread:$0]  %s409, 16, %s7, [#allocation5]
    $region37: #{tpu_custom_call.1} parent=1 // pred_fallthru
      _
    // Predicated region
    $region38: #{tpu_custom_call.1} parent=1 // pred_check
      _
    $region39: #{tpu_custom_call.1} parent=1 // pred_check_branch
      %413 = sbr.rel (0) target = $region41
    $region40: #{tpu_custom_call.1} parent=1 // pred_region
      %414 = dma.done [#allocation5], 16
    $region41: #{tpu_custom_call.1} parent=1 // pred_fallthru
      _
    %415 = vsyncpa [#allocation4], 1
    %416 = vsyncpa [#allocation5], 1

</llo_original>
